<compile_context>
chip_gen: v7x
topology: tpu7x:2x2x1
jax: 0.10.0
libtpu: 0.0.40
codegen_flags: <defaults>
</compile_context>

<pallas_src>
import jax
import jax.numpy as jnp
from jax.experimental import pallas as pl
from jax.experimental.pallas import tpu as pltpu


def _round_up(x, m):
    return (x + m - 1) // m * m


def _agent_kernel(x_ref, w1_ref, b1_ref, w2_ref, b2_ref, out_ref):
    # f32 -> bf16 cast happens in-kernel (VPU, hidden under the input DMA) so the
    # wrapper never spends a separate HBM pass on dtype conversion.
    x = x_ref[...].astype(jnp.bfloat16)                                 # (TM, D)
    h = jnp.dot(x, w1_ref[...], preferred_element_type=jnp.float32)     # (TM, H) f32
    h = jnp.maximum(h + b1_ref[...], 0.0)                               # bias + ReLU (f32)
    logits = jnp.dot(h.astype(jnp.bfloat16), w2_ref[...],
                     preferred_element_type=jnp.float32) + b2_ref[...]  # (TM, A) f32
    # numerically stable softmax over the last dim (== nn.Softmax(dim=-1)),
    # exact divide so each row sums to 1 up to f32 rounding.
    m = jnp.max(logits, axis=-1, keepdims=True)
    e = jnp.exp(logits - m)
    denom = jnp.sum(e, axis=-1, keepdims=True)
    out_ref[...] = (e / denom).astype(out_ref.dtype)


def agent_forward(state, w1, b1, w2, b2, *, block_rows=1024):
    """softmax(relu(state @ w1 + b1) @ w2 + b2)

    state: (B, input_dim) f32
    w1: (input_dim, 128) f32, b1: (1, 128) f32
    w2: (128, num_actions) f32, b2: (1, num_actions) f32
    Returns (B, num_actions) f32 probabilities.
    """
    B, D = state.shape
    H = w1.shape[1]
    A = w2.shape[1]

    # Batch tile: as large as possible (amortize ~0.35us/step, fat DMAs), but
    #  - never larger than the (8-aligned) batch,
    #  - >= 2 balanced grid steps when B > 8 so the "parallel" axis can occupy
    #    both TensorCores on v7x,
    #  - capped at 8192 rows so f32 intermediates + double-buffered tiles stay
    #    well inside v7x's 64 MiB (32 MiB default-scoped) VMEM.
    tm = _round_up(B, 8)
    if B > 8:
        tm = min(tm, _round_up(pl.cdiv(B, 2), 8))
    tm = max(8, min(tm, block_rows, 8192))

    grid = (pl.cdiv(B, tm),)  # ragged last block handled by Pallas (masked writes)

    # Weights/biases are tiny; cast weights to bf16 in the wrapper.
    w1_bf16 = w1.astype(jnp.bfloat16)
    w2_bf16 = w2.astype(jnp.bfloat16)

    vmem = pltpu.MemorySpace.VMEM

    out = pl.pallas_call(
        _agent_kernel,
        out_shape=jax.ShapeDtypeStruct((B, A), jnp.float32),
        grid=grid,
        in_specs=[
            # batch-tiled activations (streamed f32; cast in-kernel)
            pl.BlockSpec((tm, D), lambda i: (i, 0), memory_space=vmem),
            # weights / biases: constant index_map -> DMA'd once, VMEM-resident
            pl.BlockSpec((D, H), lambda i: (0, 0), memory_space=vmem),
            pl.BlockSpec((1, H), lambda i: (0, 0), memory_space=vmem),
            pl.BlockSpec((H, A), lambda i: (0, 0), memory_space=vmem),
            pl.BlockSpec((1, A), lambda i: (0, 0), memory_space=vmem),
        ],
        out_specs=pl.BlockSpec((tm, A), lambda i: (i, 0), memory_space=vmem),
        compiler_params=pltpu.CompilerParams(
            # batch tiles are independent -> shard across both TCs on v7x
            dimension_semantics=("parallel",),
        ),
    )(state, w1_bf16, b1, w2_bf16, b2)

    return out


def init_params(key, input_dim, num_actions, hidden=128):
    """Deterministic init mimicking PyTorch Linear default (uniform +-1/sqrt(fan_in))."""
    k1, k2, k3, k4 = jax.random.split(key, 4)
    lim1 = 1.0 / jnp.sqrt(jnp.float32(input_dim))
    lim2 = 1.0 / jnp.sqrt(jnp.float32(hidden))
    w1 = jax.random.uniform(k1, (input_dim, hidden), jnp.float32, -lim1, lim1)
    b1 = jax.random.uniform(k2, (1, hidden), jnp.float32, -lim1, lim1)
    w2 = jax.random.uniform(k3, (hidden, num_actions), jnp.float32, -lim2, lim2)
    b2 = jax.random.uniform(k4, (1, num_actions), jnp.float32, -lim2, lim2)
    return w1, b1, w2, b2


def _reference(state, w1, b1, w2, b2):
    h = jnp.maximum(state @ w1 + b1, 0.0)
    return jax.nn.softmax(h @ w2 + b2, axis=-1)


if __name__ == "__main__":
    key = jax.random.PRNGKey(0)
    input_dim, num_actions = 32, 8
    k_state, k_params, k_big = jax.random.split(key, 3)
    w1, b1, w2, b2 = init_params(k_params, input_dim, num_actions)

    # small per-step batch (as the RL agent would use)
    state_small = jax.random.normal(k_state, (8, input_dim), jnp.float32)
    out_small = jax.block_until_ready(agent_forward(state_small, w1, b1, w2, b2))
    ref_small = _reference(state_small, w1, b1, w2, b2)
    assert out_small.shape == (8, num_actions)
    assert jnp.allclose(out_small, ref_small, atol=2e-2, rtol=2e-2)  # bf16 matmul tolerance
    assert jnp.allclose(jnp.sum(out_small, axis=-1), 1.0, atol=1e-3)  # exact softmax divide

    # larger batch exercising >=2 grid steps and a ragged (non-divisible) last block
    state_big = jax.random.normal(k_big, (1000, input_dim), jnp.float32)
    out_big = jax.block_until_ready(
        agent_forward(state_big, w1, b1, w2, b2, block_rows=256))
    ref_big = _reference(state_big, w1, b1, w2, b2)
    assert out_big.shape == (1000, num_actions)
    assert jnp.allclose(out_big, ref_big, atol=2e-2, rtol=2e-2)
    assert jnp.allclose(jnp.sum(out_big, axis=-1), 1.0, atol=1e-3)

    print("KERNEL_OK")
</pallas_src>

<mosaic_0001>
module attributes {stable_mosaic.version = 11 : i64} {
  func.func @_agent_kernel(%arg0: i32, %arg1: memref<8x32xf32, #tpu.memory_space<vmem>>, %arg2: memref<32x128xbf16, #tpu.memory_space<vmem>>, %arg3: memref<1x128xf32, #tpu.memory_space<vmem>>, %arg4: memref<128x8xbf16, #tpu.memory_space<vmem>>, %arg5: memref<1x8xf32, #tpu.memory_space<vmem>>, %arg6: memref<8x8xf32, #tpu.memory_space<vmem>>) attributes {dimension_semantics = [#tpu.dimension_semantics<parallel>], iteration_bounds = array<i64: 1>, scalar_prefetch = 0 : i64, scratch_operands = 0 : i64, tpu.core_type = #tpu.core_type<tc>, window_params = [{transform_indices = @transform_0, window_bounds = array<i64: 8, 32>}, {pipeline_mode = #tpu.pipeline_mode<synchronous>, transform_indices = @transform_1, window_bounds = array<i64: 32, 128>}, {pipeline_mode = #tpu.pipeline_mode<synchronous>, transform_indices = @transform_2, window_bounds = array<i64: 1, 128>}, {pipeline_mode = #tpu.pipeline_mode<synchronous>, transform_indices = @transform_3, window_bounds = array<i64: 128, 8>}, {pipeline_mode = #tpu.pipeline_mode<synchronous>, transform_indices = @transform_4, window_bounds = array<i64: 1, 8>}, {transform_indices = @transform_5, window_bounds = array<i64: 8, 8>}]} {
    %c0 = arith.constant 0 : index
    %c0_0 = arith.constant 0 : index
    %0 = vector.load %arg1[%c0, %c0_0] : memref<8x32xf32, #tpu.memory_space<vmem>>, vector<8x32xf32>
    %1 = arith.truncf %0 : vector<8x32xf32> to vector<8x32xbf16>
    %c0_1 = arith.constant 0 : index
    %c0_2 = arith.constant 0 : index
    %2 = vector.load %arg2[%c0_1, %c0_2] : memref<32x128xbf16, #tpu.memory_space<vmem>>, vector<32x128xbf16>
    %cst = arith.constant dense<0.000000e+00> : vector<8x128xf32>
    %3 = tpu.matmul %1, %2, %cst {dimension_numbers = #tpu.dot_dimension_numbers<[1], [0], [0], [1], [0, 0, 1, 1], [], []>} : vector<8x32xbf16>, vector<32x128xbf16>, vector<8x128xf32> -> vector<8x128xf32>
    %c0_3 = arith.constant 0 : index
    %c0_4 = arith.constant 0 : index
    %4 = vector.load %arg3[%c0_3, %c0_4] : memref<1x128xf32, #tpu.memory_space<vmem>>, vector<1x128xf32>
    %5 = vector.broadcast %4 : vector<1x128xf32> to vector<8x128xf32>
    %6 = arith.addf %3, %5 : vector<8x128xf32>
    %cst_5 = arith.constant 0.000000e+00 : f32
    %7 = vector.broadcast %cst_5 : f32 to vector<8x128xf32>
    %8 = arith.maximumf %6, %7 : vector<8x128xf32>
    %9 = arith.truncf %8 : vector<8x128xf32> to vector<8x128xbf16>
    %c0_6 = arith.constant 0 : index
    %c0_7 = arith.constant 0 : index
    %10 = vector.load %arg4[%c0_6, %c0_7] : memref<128x8xbf16, #tpu.memory_space<vmem>>, vector<128x8xbf16>
    %cst_8 = arith.constant dense<0.000000e+00> : vector<8x8xf32>
    %11 = tpu.matmul %9, %10, %cst_8 {dimension_numbers = #tpu.dot_dimension_numbers<[1], [0], [0], [1], [0, 0, 1, 1], [], []>} : vector<8x128xbf16>, vector<128x8xbf16>, vector<8x8xf32> -> vector<8x8xf32>
    %c0_9 = arith.constant 0 : index
    %c0_10 = arith.constant 0 : index
    %12 = vector.load %arg5[%c0_9, %c0_10] : memref<1x8xf32, #tpu.memory_space<vmem>>, vector<1x8xf32>
    %13 = vector.broadcast %12 : vector<1x8xf32> to vector<8x8xf32>
    %14 = arith.addf %11, %13 : vector<8x8xf32>
    %cst_11 = arith.constant dense<0xFF800000> : vector<8xf32>
    %15 = vector.multi_reduction <maximumf>, %14, %cst_11 [1] : vector<8x8xf32> to vector<8xf32>
    %16 = vector.shape_cast %15 : vector<8xf32> to vector<8x1xf32>
    %17 = vector.broadcast %16 : vector<8x1xf32> to vector<8x8xf32>
    %18 = arith.subf %14, %17 : vector<8x8xf32>
    %19 = math.exp %18 : vector<8x8xf32>
    %cst_12 = arith.constant dense<0.000000e+00> : vector<8xf32>
    %20 = vector.multi_reduction <add>, %19, %cst_12 [1] : vector<8x8xf32> to vector<8xf32>
    %21 = vector.shape_cast %20 : vector<8xf32> to vector<8x1xf32>
    %22 = vector.broadcast %21 : vector<8x1xf32> to vector<8x8xf32>
    %23 = arith.divf %19, %22 : vector<8x8xf32>
    %c0_13 = arith.constant 0 : index
    %c0_14 = arith.constant 0 : index
    %24 = vector.load %arg6[%c0_13, %c0_14] : memref<8x8xf32, #tpu.memory_space<vmem>>, vector<8x8xf32>
    tpu.vector_store %arg6[%c0_13, %c0_14], %23 {strides = array<i32>} : memref<8x8xf32, #tpu.memory_space<vmem>>, vector<8x8xf32>,
    return
  }
  func.func @transform_0(%arg0: i32) -> (i32, i32) {
    %c0_i32 = arith.constant 0 : i32
    %c0_i32_0 = arith.constant 0 : i32
    return %arg0, %c0_i32 : i32, i32
  }
  func.func @transform_1(%arg0: i32) -> (i32, i32) {
    %c0_i32 = arith.constant 0 : i32
    %c0_i32_0 = arith.constant 0 : i32
    %c0_i32_1 = arith.constant 0 : i32
    return %c0_i32, %c0_i32_0 : i32, i32
  }
  func.func @transform_2(%arg0: i32) -> (i32, i32) {
    %c0_i32 = arith.constant 0 : i32
    %c0_i32_0 = arith.constant 0 : i32
    %c0_i32_1 = arith.constant 0 : i32
    return %c0_i32, %c0_i32_0 : i32, i32
  }
  func.func @transform_3(%arg0: i32) -> (i32, i32) {
    %c0_i32 = arith.constant 0 : i32
    %c0_i32_0 = arith.constant 0 : i32
    %c0_i32_1 = arith.constant 0 : i32
    return %c0_i32, %c0_i32_0 : i32, i32
  }
  func.func @transform_4(%arg0: i32) -> (i32, i32) {
    %c0_i32 = arith.constant 0 : i32
    %c0_i32_0 = arith.constant 0 : i32
    %c0_i32_1 = arith.constant 0 : i32
    return %c0_i32, %c0_i32_0 : i32, i32
  }
  func.func @transform_5(%arg0: i32) -> (i32, i32) {
    %c0_i32 = arith.constant 0 : i32
    %c0_i32_0 = arith.constant 0 : i32
    return %arg0, %c0_i32 : i32, i32
  }
}

</mosaic_0001>

<llo_original>
// kernel: tpu_custom_call.1
$region0: #{tpu_custom_call.1}
  #allocation0 [shape = 'u32[]', space=smem, size = 0x4, offset = 0x4, fixed_abs, tag = 'smem constant byte address 0x4 - core index']
  #allocation1 [shape = 'u32[144,128]{1,0:T(1,128)}', space=vmem, size = 0x12000, scoped, tag = 'internal scratch']
  %s0 = inlined_call_operand.vmem [shape: f32[8,32], index: 0, kind: input, shape index: {}]
  %s1 = inlined_call_operand.vmem [shape: bf16[32,128], index: 1, kind: input, shape index: {}]
  %s2 = inlined_call_operand.vmem [shape: f32[1,128], index: 2, kind: input, shape index: {}]
  %s3 = inlined_call_operand.vmem [shape: bf16[128,8], index: 3, kind: input, shape index: {}]
  %s4 = inlined_call_operand.vmem [shape: f32[1,8], index: 4, kind: input, shape index: {}]
  %s5 = inlined_call_operand.hbm [shape: f32[8,8], index: 5, kind: output, shape index: {}]
  %s6 = sld [smem:[#allocation0]]
  $region30: #{tpu_custom_call.1} parent=0
    _
  %s8 = ssub.s32 1, %s6
  %s9 = scalar_select 0, %s8, %s6
  $region1: #{tpu_custom_call.1} parent=0
    #allocation2 [shape = 'u8[4096]{0}', space=vmem, size = 0x1000, scoped, tag = 'output window, operand 0, single buffered']
    #allocation3 [shape = 's32[1]{0}', space=sflag, size = 0x4, scoped, tag = 'scoped memory for tpu_custom_call.1']
    %10 = vsyncpa [#allocation3], 0
    // Predicated region
    $region2: #{tpu_custom_call.1} parent=1 // pred_check
      _
    $region3: #{tpu_custom_call.1} parent=1 // pred_check_branch
      %12 = sbr.rel (0) target = $region5
    $region4: #{tpu_custom_call.1} parent=1 // pred_region
      _
    $region5: #{tpu_custom_call.1} parent=1 // pred_fallthru
      _
    // Predicated region
    $region6: #{tpu_custom_call.1} parent=1 // pred_check
      _
    $region7: #{tpu_custom_call.1} parent=1 // pred_check_branch
      %14 = sbr.rel (0) target = $region9
    $region8: #{tpu_custom_call.1} parent=1 // pred_region
      _
    $region9: #{tpu_custom_call.1} parent=1 // pred_fallthru
      _
    // Predicated region
    $region10: #{tpu_custom_call.1} parent=1 // pred_check
      _
    $region11: #{tpu_custom_call.1} parent=1 // pred_check_branch
      %16 = sbr.rel (0) target = $region13
    $region12: #{tpu_custom_call.1} parent=1 // pred_region
      _
    $region13: #{tpu_custom_call.1} parent=1 // pred_fallthru
      _
    // Predicated region
    $region14: #{tpu_custom_call.1} parent=1 // pred_check
      _
    $region15: #{tpu_custom_call.1} parent=1 // pred_check_branch
      %18 = sbr.rel (0) target = $region17
    $region16: #{tpu_custom_call.1} parent=1 // pred_region
      _
    $region17: #{tpu_custom_call.1} parent=1 // pred_fallthru
      _
    // Predicated region
    $region18: #{tpu_custom_call.1} parent=1 // pred_check
      _
    $region19: #{tpu_custom_call.1} parent=1 // pred_check_branch
      %20 = sbr.rel (0) target = $region21
    $region20: #{tpu_custom_call.1} parent=1 // pred_region
      _
    $region21: #{tpu_custom_call.1} parent=1 // pred_fallthru
      _
    %v22 = vld [vmem:[%s0] sm:$0xff]
    %v23 = vpack.c.bf16 %v22, %v22
    %v24 = vld [vmem:[%s1] sm:$0xf]
    %v25 = vld [vmem:[%s1 + $0x4] sm:$0xf]
    %v26 = vld [vmem:[%s1 + $0x8] sm:$0xf]
    %v27 = vld [vmem:[%s1 + $0xc] sm:$0xf]
    %v28 = vld [vmem:[%s2] sm:$0x1]
    %v30 = vlaneseq
    %v31 = vshrl.u32 %v30, 7
    %v32 = vsub.s32 0, %v31
    %v33 = vrot.slane %v28, %v32
    %v39 = vunpack.c.l.b16 %v24
    %v40 = vunpack.c.l.b16 %v25
    %v41 = vunpack.c.l.b16 %v26
    %v42 = vunpack.c.l.b16 %v27
    %v43 = vpack.c.b16 %v40, %v39
    %v44 = vpack.c.b16 %v42, %v41
    %vm47 = vcmask 261120
    %v49 = vsel %vm47, %v23, 0
    %51 = vmatprep.subr.bf16.mxu0 0
    %52 = vmatpush1.bf16.msra.mxu0 %v43
    %53 = vmatprep.subr.bf16.mxu0 0
    %54 = vmatpush1.bf16.msra.mxu0 %v44
    %55 = vmatprep.subr.bf16.mxu0 0
    %56 = vmatpush1.bf16.msra.mxu0 0
    %57 = vmatprep.subr.bf16.mxu0 0
    %58 = vmatpush1.bf16.msra.mxu0 0
    %59 = vmatprep.subr.bf16.mxu0 0
    %60 = vmatpush1.bf16.msra.mxu0 0
    %61 = vmatprep.subr.bf16.mxu0 0
    %62 = vmatpush1.bf16.msra.mxu0 0
    %63 = vmatprep.subr.bf16.mxu0 0
    %64 = vmatpush1.bf16.msra.mxu0 0
    %65 = vmatprep.subr.bf16.mxu0 0
    %66 = vmatpush1.bf16.msra.mxu0 0
    %67 = vmatprep.subr.bf16.mxu0 0
    %68 = vmatpush1.bf16.msra.mxu0 0
    %69 = vmatprep.subr.bf16.mxu0 0
    %70 = vmatpush1.bf16.msra.mxu0 0
    %71 = vmatprep.subr.bf16.mxu0 0
    %72 = vmatpush1.bf16.msra.mxu0 0
    %73 = vmatprep.subr.bf16.mxu0 0
    %74 = vmatpush1.bf16.msra.mxu0 0
    %75 = vmatprep.subr.bf16.mxu0 0
    %76 = vmatpush1.bf16.msra.mxu0 0
    %77 = vmatprep.subr.bf16.mxu0 0
    %78 = vmatpush1.bf16.msra.mxu0 0
    %79 = vmatprep.subr.bf16.mxu0 0
    %80 = vmatpush1.bf16.msra.mxu0 0
    %81 = vmatprep.subr.bf16.mxu0 0
    %82 = vmatpush1.bf16.msra.mxu0 0
    %83 = vmatprep.mubr.bf16.mxu0 0
    %84 = vmatmul.mubr.bf16.gmra.mrb[0].mxu0 %v49
    %v85 = vpop.f32.mrb[0].mxu0
    %v86 = vadd.f32 %v33, %v85
    %v87 = vpop.f32.mrb[0].mxu0
    %v88 = vpop.f32.mrb[0].mxu0
    %v89 = vpop.f32.mrb[0].mxu0
    %90 = vdwg.mxu0
    %v91 = vmax.f32 %v86, 0.0
    %v92 = vpack.c.bf16 %v91, %v91
    %v93 = vld [vmem:[%s3] sm:$0xf]
    %v94 = vld [vmem:[%s3 + $0x4] sm:$0xf]
    %v95 = vld [vmem:[%s3 + $0x8] sm:$0xf]
    %v96 = vld [vmem:[%s3 + $0xc] sm:$0xf]
    %v97 = vld [vmem:[%s3 + $0x10] sm:$0xf]
    %v98 = vld [vmem:[%s3 + $0x14] sm:$0xf]
    %v99 = vld [vmem:[%s3 + $0x18] sm:$0xf]
    %v100 = vld [vmem:[%s3 + $0x1c] sm:$0xf]
    %v101 = vld [vmem:[%s3 + $0x20] sm:$0xf]
    %v102 = vld [vmem:[%s3 + $0x24] sm:$0xf]
    %v103 = vld [vmem:[%s3 + $0x28] sm:$0xf]
    %v104 = vld [vmem:[%s3 + $0x2c] sm:$0xf]
    %v105 = vld [vmem:[%s3 + $0x30] sm:$0xf]
    %v106 = vld [vmem:[%s3 + $0x34] sm:$0xf]
    %v107 = vld [vmem:[%s3 + $0x38] sm:$0xf]
    %v108 = vld [vmem:[%s3 + $0x3c] sm:$0xf]
    %v109 = vld [vmem:[%s4] sm:$0x1]
    %v111 = vlaneseq
    %v112 = vshrl.u32 %v111, 7
    %v113 = vsub.s32 0, %v112
    %v114 = vrot.slane %v109, %v113
    %v132 = vunpack.c.l.b16 %v93
    %v133 = vunpack.c.l.b16 %v94
    %v134 = vunpack.c.l.b16 %v95
    %v135 = vunpack.c.l.b16 %v96
    %v136 = vunpack.c.l.b16 %v97
    %v137 = vunpack.c.l.b16 %v98
    %v138 = vunpack.c.l.b16 %v99
    %v139 = vunpack.c.l.b16 %v100
    %v140 = vunpack.c.l.b16 %v101
    %v141 = vunpack.c.l.b16 %v102
    %v142 = vunpack.c.l.b16 %v103
    %v143 = vunpack.c.l.b16 %v104
    %v144 = vunpack.c.l.b16 %v105
    %v145 = vunpack.c.l.b16 %v106
    %v146 = vunpack.c.l.b16 %v107
    %v147 = vunpack.c.l.b16 %v108
    %v148 = vpack.c.b16 %v133, %v132
    %v149 = vpack.c.b16 %v135, %v134
    %v150 = vpack.c.b16 %v137, %v136
    %v151 = vpack.c.b16 %v139, %v138
    %v152 = vpack.c.b16 %v141, %v140
    %v153 = vpack.c.b16 %v143, %v142
    %v154 = vpack.c.b16 %v145, %v144
    %v155 = vpack.c.b16 %v147, %v146
    %164 = vmatprep.subr.bf16.mxu0 0
    %165 = vmatpush1.bf16.msra.mxu0 %v148
    %166 = vmatprep.subr.bf16.mxu0 0
    %167 = vmatpush1.bf16.msra.mxu0 %v149
    %168 = vmatprep.subr.bf16.mxu0 0
    %169 = vmatpush1.bf16.msra.mxu0 %v150
    %170 = vmatprep.subr.bf16.mxu0 0
    %171 = vmatpush1.bf16.msra.mxu0 %v151
    %172 = vmatprep.subr.bf16.mxu0 0
    %173 = vmatpush1.bf16.msra.mxu0 %v152
    %174 = vmatprep.subr.bf16.mxu0 0
    %175 = vmatpush1.bf16.msra.mxu0 %v153
    %176 = vmatprep.subr.bf16.mxu0 0
    %177 = vmatpush1.bf16.msra.mxu0 %v154
    %178 = vmatprep.subr.bf16.mxu0 0
    %179 = vmatpush1.bf16.msra.mxu0 %v155
    %180 = vmatprep.subr.bf16.mxu0 0
    %181 = vmatpush1.bf16.msra.mxu0 0
    %182 = vmatprep.subr.bf16.mxu0 0
    %183 = vmatpush1.bf16.msra.mxu0 0
    %184 = vmatprep.subr.bf16.mxu0 0
    %185 = vmatpush1.bf16.msra.mxu0 0
    %186 = vmatprep.subr.bf16.mxu0 0
    %187 = vmatpush1.bf16.msra.mxu0 0
    %188 = vmatprep.subr.bf16.mxu0 0
    %189 = vmatpush1.bf16.msra.mxu0 0
    %190 = vmatprep.subr.bf16.mxu0 0
    %191 = vmatpush1.bf16.msra.mxu0 0
    %192 = vmatprep.subr.bf16.mxu0 0
    %193 = vmatpush1.bf16.msra.mxu0 0
    %194 = vmatprep.subr.bf16.mxu0 0
    %195 = vmatpush1.bf16.msra.mxu0 0
    %196 = vmatprep.mubr.bf16.mxu0 0
    %197 = vmatmul.mubr.bf16.gmra.mrb[0].mxu0 %v92
    %v198 = vpop.f32.mrb[0].mxu0
    %v199 = vadd.f32 %v114, %v198
    %v200 = vpop.f32.mrb[0].mxu0
    %v201 = vpop.f32.mrb[0].mxu0
    %v202 = vpop.f32.mrb[0].mxu0
    %203 = vdwg.mxu0
    %vm204 = vcmask 64512
    %v205 = vsel %vm204, %v199, -inf
    %206 = vmax.xlane.f32.xlu0 %v205
    %v207 = vpop.xlane.xlu0 %206
    %v208 = vsub.f32 %v199, %v207
    %v209 = vmul.f32 %v208, 1.442695
    %v210 = vpow.pop %v209
    %v211 = vsel %vm204, %v210, 0.0
    %212 = vadd.xlane.f32.xlu0 %v211
    %v213 = vpop.xlane.xlu0 %212
    %v214 = vrcp.pop %v213
    %v215 = vmul.f32 %v210, %v214
    %216 = vst.msk [vmem:[#allocation2] sm:$0xff] %vm204, %v215
    // Predicated region
    $region22: #{tpu_custom_call.1} parent=1 // pred_check
      _
    $region23: #{tpu_custom_call.1} parent=1 // pred_check_branch
      %218 = sbr.rel (0) target = $region25
    $region24: #{tpu_custom_call.1} parent=1 // pred_region
      %s220 = ssub.s32 128, 128
      %221 = vsyncadd [#allocation3], %s220
      %s223 = sshll.u32 [#allocation2], 4
      %s224 = int_to_ptr.vmem [resolvable:$true] %s223
      %226 = dma.vmem_to_hbm [thread:$0]  %s224, 128, %s5, [#allocation3]
    $region25: #{tpu_custom_call.1} parent=1 // pred_fallthru
      _
    // Predicated region
    $region26: #{tpu_custom_call.1} parent=1 // pred_check
      _
    $region27: #{tpu_custom_call.1} parent=1 // pred_check_branch
      %228 = sbr.rel (0) target = $region29
    $region28: #{tpu_custom_call.1} parent=1 // pred_region
      %229 = dma.done [#allocation3], 128
    $region29: #{tpu_custom_call.1} parent=1 // pred_fallthru
      _
    %230 = vsyncpa [#allocation3], 1

</llo_original>
